<compile_context>
chip_gen: v7x
topology: tpu7x:2x2x1
jax: 0.10.0
libtpu: 0.0.40
codegen_flags: <defaults>
</compile_context>

<pallas_src>
import jax
import jax.numpy as jnp
from jax.experimental import pallas as pl
from jax.experimental.pallas import tpu as pltpu


def _round_up(x, m):
    return ((x + m - 1) // m) * m


def _sampler_kernel(do_ref, w_ref, pts_ref):
    # do_ref : (TN, 8)   = [dir_x dir_y dir_z | org_x org_y org_z | 0 0]
    # w_ref  : (8, 3*D)  constant RHS:
    #            rows 0..2: W[c, d*3 + c2] = z[d] * (c == c2)
    #            rows 3..5: W[3+c, d*3 + c2] = (c == c2)
    #            rows 6..7: 0
    # pts_ref: (TN, 3*D) PyTorch-interleaved:
    #            pts[n, d*3 + c] = z[d] * dir[n, c] + org[n, c]
    pts_ref[...] = jnp.dot(do_ref[...], w_ref[...],
                           preferred_element_type=jnp.float32)


def _choose_tile(N, D, *, max_tile=4096, vmem_budget_bytes=24 << 20):
    """Pick a ray tile that fits the double-buffered VMEM budget and keeps the
    parallel grid multi-step for large N (v7x megacore)."""
    lanes_out = _round_up(3 * D, 128)   # output block lane-pads 3D -> mult of 128
    lanes_in = 128                      # (tile, 8) f32 block lane-pads to 128
    bytes_per_row = 4 * 2 * (lanes_out + lanes_in)   # double-buffered in + out
    tile = min(max_tile, max(8, (vmem_budget_bytes // bytes_per_row) // 8 * 8))
    n8 = _round_up(N, 8)
    if n8 > 512:
        # Several grid steps so the "parallel" axis can split across both v7x
        # TensorCores, but never below 512 rows (~85% of HBM roofline).
        tile = min(tile, max(512, _round_up(pl.cdiv(N, 8), 8)))
    return min(tile, n8)


def stratified_raysampler(origins, directions, *, n_pts_per_ray, min_depth,
                          max_depth, tile_n=None):
    """Pallas implementation of StratifiedRaysampler.forward.

    origins, directions: (N, 3) float32
    returns: sample_points (N, D, 3), sample_lengths (N, D, 1)
    """
    origins = jnp.asarray(origins, jnp.float32)
    directions = jnp.asarray(directions, jnp.float32)
    N, C = directions.shape
    assert C == 3
    D = int(n_pts_per_ray)

    if tile_n is None:
        tile = _choose_tile(N, D)
    else:
        tile = max(8, _round_up(min(int(tile_n), _round_up(N, 8)), 8))
    grid = pl.cdiv(N, tile)

    # z matches torch.linspace bitwise behavior (last element pinned to max_depth).
    z = jnp.linspace(jnp.float32(min_depth), jnp.float32(max_depth), D,
                     dtype=jnp.float32)                                # (D,)

    # Constant MXU RHS: output lane j = d*3 + c.
    eye3 = jnp.eye(3, dtype=jnp.float32)                               # (3, 3)
    w_dir = (z[None, :, None] * eye3[:, None, :]).reshape(3, 3 * D)    # (3, 3D)
    w_org = jnp.tile(eye3[:, None, :], (1, D, 1)).reshape(3, 3 * D)    # (3, 3D)
    w = jnp.concatenate(
        [w_dir, w_org, jnp.zeros((2, 3 * D), jnp.float32)], axis=0)    # (8, 3D)

    # Fuse directions + origins (+2 zero pad cols) into one (N, 8) input.
    do = jnp.concatenate(
        [directions, origins, jnp.zeros((N, 2), jnp.float32)], axis=1)  # (N, 8)

    pts_flat = pl.pallas_call(
        _sampler_kernel,
        out_shape=jax.ShapeDtypeStruct((N, 3 * D), jnp.float32),
        grid_spec=pltpu.PrefetchScalarGridSpec(
            num_scalar_prefetch=0,
            grid=(grid,),
            in_specs=[
                pl.BlockSpec((tile, 8), lambda i: (i, 0)),        # fused dirs|orig
                pl.BlockSpec((8, 3 * D), lambda i: (0, 0)),       # constant W
            ],
            out_specs=pl.BlockSpec((tile, 3 * D), lambda i: (i, 0)),
        ),
        compiler_params=pltpu.CompilerParams(
            dimension_semantics=("parallel",),
            vmem_limit_bytes=48 << 20),
        cost_estimate=pl.CostEstimate(
            flops=2 * N * 8 * 3 * D,
            transcendentals=0,
            bytes_accessed=4 * (N * 3 * D + N * 8 + 8 * 3 * D)),
    )(do, w)

    # (N, 3*D) interleaved -> row-major (N, D, 3): a free reshape, no transpose,
    # no padding slice.
    sample_points = pts_flat.reshape(N, D, 3)

    # sample_lengths is ray-independent broadcast data; it is kept dense only
    # for PyTorch-forward parity.
    # TODO(synk): downstream consumers should keep just the (D,) linspace and
    # broadcast lazily instead of materializing (N, D, 1) in HBM.
    sample_lengths = jnp.broadcast_to(z[None, :, None], (N, D, 1))
    return sample_points, sample_lengths


def _check(origins, directions, n_pts_per_ray, min_depth, max_depth):
    N = directions.shape[0]
    pts, lens = stratified_raysampler(
        origins, directions,
        n_pts_per_ray=n_pts_per_ray, min_depth=min_depth, max_depth=max_depth)
    jax.block_until_ready((pts, lens))
    z = jnp.linspace(min_depth, max_depth, n_pts_per_ray, dtype=jnp.float32)
    ref_pts = z[None, :, None] * directions[:, None, :] + origins[:, None, :]
    ref_len = jnp.broadcast_to(z[None, :, None], (N, n_pts_per_ray, 1))
    assert pts.shape == (N, n_pts_per_ray, 3)
    assert lens.shape == (N, n_pts_per_ray, 1)
    assert jnp.allclose(pts, ref_pts, atol=1e-5)
    assert jnp.allclose(lens, ref_len, atol=1e-5)


if __name__ == "__main__":
    # cfg: n_pts_per_ray=64, min_depth=0.1, max_depth=5.0 (deterministic, in-script)
    n_pts_per_ray = 64
    min_depth = 0.1
    max_depth = 5.0

    key = jax.random.PRNGKey(0)
    k_o, k_d = jax.random.split(key)

    # Small case (single block).
    N = 16
    origins = jax.random.normal(k_o, (N, 3), dtype=jnp.float32)
    directions = jax.random.normal(k_d, (N, 3), dtype=jnp.float32)
    _check(origins, directions, n_pts_per_ray, min_depth, max_depth)

    # Ragged multi-block case (N not a multiple of the tile, 2 grid steps).
    N2 = 600
    origins2 = jax.random.normal(k_o, (N2, 3), dtype=jnp.float32)
    directions2 = jax.random.normal(k_d, (N2, 3), dtype=jnp.float32)
    _check(origins2, directions2, n_pts_per_ray, min_depth, max_depth)

    print("KERNEL_OK")
</pallas_src>

<mosaic_0001>
module attributes {stable_mosaic.version = 11 : i64} {
  func.func @_sampler_kernel(%arg0: i32, %arg1: memref<16x8xf32, #tpu.memory_space<vmem>>, %arg2: memref<8x192xf32, #tpu.memory_space<vmem>>, %arg3: memref<16x192xf32, #tpu.memory_space<vmem>>) attributes {dimension_semantics = [#tpu.dimension_semantics<parallel>], iteration_bounds = array<i64: 1>, scalar_prefetch = 0 : i64, scratch_operands = 0 : i64, tpu.core_type = #tpu.core_type<tc>, window_params = [{transform_indices = @transform_0, window_bounds = array<i64: 16, 8>}, {pipeline_mode = #tpu.pipeline_mode<synchronous>, transform_indices = @transform_1, window_bounds = array<i64: 8, 192>}, {transform_indices = @transform_2, window_bounds = array<i64: 16, 192>}]} {
    %c0 = arith.constant 0 : index
    %c0_0 = arith.constant 0 : index
    %0 = vector.load %arg1[%c0, %c0_0] : memref<16x8xf32, #tpu.memory_space<vmem>>, vector<16x8xf32>
    %c0_1 = arith.constant 0 : index
    %c0_2 = arith.constant 0 : index
    %1 = vector.load %arg2[%c0_1, %c0_2] : memref<8x192xf32, #tpu.memory_space<vmem>>, vector<8x192xf32>
    %cst = arith.constant dense<0.000000e+00> : vector<16x192xf32>
    %2 = tpu.matmul %0, %1, %cst {dimension_numbers = #tpu.dot_dimension_numbers<[1], [0], [0], [1], [0, 0, 1, 1], [], []>} : vector<16x8xf32>, vector<8x192xf32>, vector<16x192xf32> -> vector<16x192xf32>
    %c0_3 = arith.constant 0 : index
    %c0_4 = arith.constant 0 : index
    %3 = vector.load %arg3[%c0_3, %c0_4] : memref<16x192xf32, #tpu.memory_space<vmem>>, vector<16x192xf32>
    tpu.vector_store %arg3[%c0_3, %c0_4], %2 {strides = array<i32>} : memref<16x192xf32, #tpu.memory_space<vmem>>, vector<16x192xf32>,
    return
  }
  func.func @transform_0(%arg0: i32) -> (i32, i32) {
    %c0_i32 = arith.constant 0 : i32
    %c0_i32_0 = arith.constant 0 : i32
    return %arg0, %c0_i32 : i32, i32
  }
  func.func @transform_1(%arg0: i32) -> (i32, i32) {
    %c0_i32 = arith.constant 0 : i32
    %c0_i32_0 = arith.constant 0 : i32
    %c0_i32_1 = arith.constant 0 : i32
    return %c0_i32, %c0_i32_0 : i32, i32
  }
  func.func @transform_2(%arg0: i32) -> (i32, i32) {
    %c0_i32 = arith.constant 0 : i32
    %c0_i32_0 = arith.constant 0 : i32
    return %arg0, %c0_i32 : i32, i32
  }
}

</mosaic_0001>

<llo_original>
// kernel: tpu_custom_call.1
$region0: #{tpu_custom_call.1}
  #allocation0 [shape = 'u32[]', space=smem, size = 0x4, offset = 0x4, fixed_abs, tag = 'smem constant byte address 0x4 - core index']
  #allocation1 [shape = 'u32[144,128]{1,0:T(1,128)}', space=vmem, size = 0x12000, scoped, tag = 'internal scratch']
  %s0 = inlined_call_operand.vmem [shape: f32[16,8], index: 0, kind: input, shape index: {}]
  %s1 = inlined_call_operand.vmem [shape: f32[8,192], index: 1, kind: input, shape index: {}]
  %s2 = inlined_call_operand.hbm [shape: f32[16,192], index: 2, kind: output, shape index: {}]
  %s3 = sld [smem:[#allocation0]]
  $region18: #{tpu_custom_call.1} parent=0
    _
  %s5 = ssub.s32 1, %s3
  %s6 = scalar_select 0, %s5, %s3
  $region1: #{tpu_custom_call.1} parent=0
    #allocation2 [shape = 'u8[16384]{0}', space=vmem, size = 0x4000, scoped, tag = 'output window, operand 0, single buffered']
    #allocation3 [shape = 's32[1]{0}', space=sflag, size = 0x4, scoped, tag = 'scoped memory for tpu_custom_call.1']
    %7 = vsyncpa [#allocation3], 0
    // Predicated region
    $region2: #{tpu_custom_call.1} parent=1 // pred_check
      _
    $region3: #{tpu_custom_call.1} parent=1 // pred_check_branch
      %9 = sbr.rel (0) target = $region5
    $region4: #{tpu_custom_call.1} parent=1 // pred_region
      _
    $region5: #{tpu_custom_call.1} parent=1 // pred_fallthru
      _
    // Predicated region
    $region6: #{tpu_custom_call.1} parent=1 // pred_check
      _
    $region7: #{tpu_custom_call.1} parent=1 // pred_check_branch
      %11 = sbr.rel (0) target = $region9
    $region8: #{tpu_custom_call.1} parent=1 // pred_region
      _
    $region9: #{tpu_custom_call.1} parent=1 // pred_fallthru
      _
    %v12 = vld [vmem:[%s0] sm:$0xff]
    %v13 = vld [vmem:[%s0 + $0x8] sm:$0xff]
    %v14 = vld [vmem:[%s1] sm:$0xff]
    %v15 = vld [vmem:[%s1 + $0x8] sm:$0xff]
    %vm16 = vcmask 64512
    %v18 = vsel %vm16, %v12, 0
    %v21 = vsel %vm16, %v13, 0
    %23 = vmatprep.subr.mxu0 %v15
    %24 = vmatpush1.msra.mxu0 %v14
    %25 = vmatprep.subr.mxu0 0.0
    %26 = vmatpush1.msra.mxu0 0.0
    %27 = vmatprep.subr.mxu0 0.0
    %28 = vmatpush1.msra.mxu0 0.0
    %29 = vmatprep.subr.mxu0 0.0
    %30 = vmatpush1.msra.mxu0 0.0
    %31 = vmatprep.subr.mxu0 0.0
    %32 = vmatpush1.msra.mxu0 0.0
    %33 = vmatprep.subr.mxu0 0.0
    %34 = vmatpush1.msra.mxu0 0.0
    %35 = vmatprep.subr.mxu0 0.0
    %36 = vmatpush1.msra.mxu0 0.0
    %37 = vmatprep.subr.mxu0 0.0
    %38 = vmatpush1.msra.mxu0 0.0
    %39 = vmatprep.subr.mxu0 0.0
    %40 = vmatpush1.msra.mxu0 0.0
    %41 = vmatprep.subr.mxu0 0.0
    %42 = vmatpush1.msra.mxu0 0.0
    %43 = vmatprep.subr.mxu0 0.0
    %44 = vmatpush1.msra.mxu0 0.0
    %45 = vmatprep.subr.mxu0 0.0
    %46 = vmatpush1.msra.mxu0 0.0
    %47 = vmatprep.subr.mxu0 0.0
    %48 = vmatpush1.msra.mxu0 0.0
    %49 = vmatprep.subr.mxu0 0.0
    %50 = vmatpush1.msra.mxu0 0.0
    %51 = vmatprep.subr.mxu0 0.0
    %52 = vmatpush1.msra.mxu0 0.0
    %53 = vmatprep.subr.mxu0 0.0
    %54 = vmatpush1.msra.mxu0 0.0
    %55 = vmatprep.subr.mxu0 0.0
    %56 = vmatpush1.msra.mxu0 0.0
    %57 = vmatprep.subr.mxu0 0.0
    %58 = vmatpush1.msra.mxu0 0.0
    %59 = vmatprep.subr.mxu0 0.0
    %60 = vmatpush1.msra.mxu0 0.0
    %61 = vmatprep.subr.mxu0 0.0
    %62 = vmatpush1.msra.mxu0 0.0
    %63 = vmatprep.subr.mxu0 0.0
    %64 = vmatpush1.msra.mxu0 0.0
    %65 = vmatprep.subr.mxu0 0.0
    %66 = vmatpush1.msra.mxu0 0.0
    %67 = vmatprep.subr.mxu0 0.0
    %68 = vmatpush1.msra.mxu0 0.0
    %69 = vmatprep.subr.mxu0 0.0
    %70 = vmatpush1.msra.mxu0 0.0
    %71 = vmatprep.subr.mxu0 0.0
    %72 = vmatpush1.msra.mxu0 0.0
    %73 = vmatprep.subr.mxu0 0.0
    %74 = vmatpush1.msra.mxu0 0.0
    %75 = vmatprep.subr.mxu0 0.0
    %76 = vmatpush1.msra.mxu0 0.0
    %77 = vmatprep.subr.mxu0 0.0
    %78 = vmatpush1.msra.mxu0 0.0
    %79 = vmatprep.subr.mxu0 0.0
    %80 = vmatpush1.msra.mxu0 0.0
    %81 = vmatprep.subr.mxu0 0.0
    %82 = vmatpush1.msra.mxu0 0.0
    %83 = vmatprep.subr.mxu0 0.0
    %84 = vmatpush1.msra.mxu0 0.0
    %85 = vmatprep.subr.mxu0 0.0
    %86 = vmatpush1.msra.mxu0 0.0
    %87 = vmatprep.mubr.f32.mxu0 0.0
    %88 = vmatmul.mubr.f32.gmra.mrb[0].mxu0 %v18
    %v89 = vpop.f32.mrb[0].mxu0
    %v90 = vadd.f32 0.0, %v89
    %v91 = vpop.f32.mrb[0].mxu0
    %v92 = vadd.f32 0.0, %v91
    %93 = vmatprep.mubr.f32.mxu0 0.0
    %94 = vmatmul.mubr.f32.gmra.mrb[0].mxu0 %v21
    %v95 = vpop.f32.mrb[0].mxu0
    %v96 = vadd.f32 0.0, %v95
    %v97 = vpop.f32.mrb[0].mxu0
    %v98 = vadd.f32 0.0, %v97
    %99 = vdwg.mxu0
    %100 = vst [vmem:[#allocation2] sm:$0xff] %v90
    %vm101 = vcmask 523264
    %102 = vst.msk [vmem:[#allocation2 + $0x8] sm:$0xff] %vm101, %v92
    %103 = vst [vmem:[#allocation2 + $0x10] sm:$0xff] %v96
    %104 = vst.msk [vmem:[#allocation2 + $0x18] sm:$0xff] %vm101, %v98
    // Predicated region
    $region10: #{tpu_custom_call.1} parent=1 // pred_check
      _
    $region11: #{tpu_custom_call.1} parent=1 // pred_check_branch
      %106 = sbr.rel (0) target = $region13
    $region12: #{tpu_custom_call.1} parent=1 // pred_region
      %s108 = ssub.s32 512, 512
      %109 = vsyncadd [#allocation3], %s108
      %s110 = sshll.u32 [#allocation2], 4
      %s111 = int_to_ptr.vmem [resolvable:$true] %s110
      %116 = dma.vmem_to_hbm [thread:$0]  %s111, 512, %s2, [#allocation3], 256, 256, 16
    $region13: #{tpu_custom_call.1} parent=1 // pred_fallthru
      _
    // Predicated region
    $region14: #{tpu_custom_call.1} parent=1 // pred_check
      _
    $region15: #{tpu_custom_call.1} parent=1 // pred_check_branch
      %118 = sbr.rel (0) target = $region17
    $region16: #{tpu_custom_call.1} parent=1 // pred_region
      %119 = dma.done [#allocation3], 512
    $region17: #{tpu_custom_call.1} parent=1 // pred_fallthru
      _
    %120 = vsyncpa [#allocation3], 1

</llo_original>
